<compile_context>
chip_gen: v5e
topology: v5e:2x2
jax: 0.10.0
libtpu: 0.0.40
codegen_flags: <defaults>
</compile_context>

<pallas_src>
import jax
import jax.numpy as jnp
from jax.experimental import pallas as pl
from jax.experimental.pallas import tpu as pltpu


def _soft_ce_plain(x, target):
    """Plain-JAX soft-target CE (used for tiny inputs, e.g. the cls head)."""
    x = x.astype(jnp.float32)
    target = target.astype(jnp.float32)
    lsm = jax.nn.log_softmax(x, axis=-1)
    return jnp.mean(jnp.sum(-target * lsm, axis=-1))


def _pick_tok_tile(n_batch, n_tok, n_classes, x_itemsize, t_itemsize,
                   per_token_targets):
    """Choose (tok_tile, vmem_limit_bytes) from the chip's VMEM capacity.

    Accounts for both double-buffered inputs (logits and, on the 3-D target
    path, the class-major per-token target block), leaves headroom for output
    buffers / compiler scratch, and keeps the requested limit well under the
    physical VMEM (v7x only has 64 MiB per core).
    """
    try:
        vmem_cap = int(pltpu.get_tpu_info().vmem_capacity_bytes)
    except Exception:
        vmem_cap = 64 << 20  # conservative: v7x per-core VMEM
    # ~48 MiB on v7x (64 MiB), 96 MiB on v5e/v6e (128 MiB; scoped default is
    # far lower so the explicit raise is still required).
    vmem_limit = max(32 << 20, min(vmem_cap * 3 // 4, 96 << 20))

    # Input bytes per token row of a block.  The 2-D path's target is a single
    # [1, C] row per block and is negligible in the per-row budget.
    per_row = n_classes * (x_itemsize + (t_itemsize if per_token_targets else 0))
    usable = max(2 << 20, vmem_limit - (8 << 20))   # headroom: outputs + scratch
    tile = usable // (2 * max(1, per_row))          # 2 pipeline buffers per input
    tile = min(tile, 2048)                          # HBM roofline saturates <~2K rows

    # Keep >= ~4 total grid blocks so DMA/compute overlap and v7x's second
    # TensorCore gets work even when B is small.
    tok_blocks_wanted = -(-4 // max(1, n_batch))    # ceil(4 / B)
    if tok_blocks_wanted > 1:
        tile = min(tile, -(-n_tok // tok_blocks_wanted))
    tile = max(1, min(tile, n_tok))

    if tile < n_tok:
        if per_token_targets:
            # tok_tile is the lane dim of the [1, C, tok_tile] target block:
            # must be a multiple of 128 (or the full N).
            tile = max(128, (tile // 128) * 128)
        else:
            # tok_tile is the logits block's sublane dim: round to the dtype's
            # sublane packing (8 f32, 16 bf16, 32 int8/fp8).
            packing = (4 // max(1, x_itemsize)) * 8
            tile = max(packing, (tile // packing) * packing)
    tile = min(tile, n_tok)
    return int(tile), int(vmem_limit)


def _make_token_soft_ce_kernel(n_tok, tok_tile, per_token_targets):
    """Per-block partial of sum over tokens of sum(-t * log_softmax(x, -1), -1)."""

    def kernel(x_ref, t_ref, out_ref):
        j = pl.program_id(1)
        x = x_ref[0].astype(jnp.float32)                         # (tok_tile, C)
        if per_token_targets:
            # Block is (1, C, tok_tile) class-major; transpose on the XLU
            # (hidden under the input DMA on this HBM-bound kernel).
            t = jnp.transpose(t_ref[0].astype(jnp.float32), (1, 0))   # (tok_tile, C)
        else:
            # Block is (1, 1, C): one target row shared by every token of this
            # batch element; broadcast over the tile's sublanes.
            t = t_ref[0].astype(jnp.float32)                     # (1, C)

        m = jnp.max(x, axis=-1, keepdims=True)
        z = x - m
        lse = jnp.log(jnp.sum(jnp.exp(z), axis=-1, keepdims=True))   # (tok_tile, 1)
        # sum(-t * (z - lse), -1) == sum(t,-1) * lse - sum(t*z,-1)
        sum_t = jnp.sum(t, axis=-1, keepdims=True)               # (tok_tile,1)/(1,1)
        sum_tz = jnp.sum(t * z, axis=-1, keepdims=True)          # (tok_tile, 1)
        loss_rows = sum_t * lse - sum_tz                         # (tok_tile, 1)

        if n_tok % tok_tile != 0:
            # Ragged last token tile: padded rows may hold garbage (inf/NaN in
            # lse) but jnp.where is a select, so masked NaNs do not propagate.
            tok_ids = j * tok_tile + jax.lax.broadcasted_iota(
                jnp.int32, (tok_tile, 1), 0)
            loss_rows = jnp.where(tok_ids < n_tok, loss_rows, 0.0)

        partial = jnp.sum(loss_rows)
        # Lane-dense, unmasked store: broadcast the scalar over the whole tile;
        # the wrapper reads element [..., 0, 0].
        out_ref[...] = jnp.broadcast_to(partial, (1, 1, 8, 128))

    return kernel


def token_soft_cross_entropy(aux_output, target, per_token_targets, *,
                             tok_tile=None):
    """mean over B*N tokens of sum(-t * log_softmax(aux_output, -1), -1).

    aux_output: [B, N, C] token logits.
    target:     [B, C]    if per_token_targets is False (row repeated per token)
                [B, C, N] if per_token_targets is True  (class-major per-token).
    """
    B, N, C = aux_output.shape
    x_itemsize = jnp.dtype(aux_output.dtype).itemsize
    t_itemsize = jnp.dtype(target.dtype).itemsize

    auto_tile, vmem_limit = _pick_tok_tile(B, N, C, x_itemsize, t_itemsize,
                                           per_token_targets)
    if tok_tile is None:
        tok_tile = auto_tile
    num_tok_blocks = pl.cdiv(N, tok_tile)

    if per_token_targets:
        assert target.shape == (B, C, N), target.shape
        t_arr = target
        t_spec = pl.BlockSpec((1, C, tok_tile), lambda b, j: (b, 0, j))
    else:
        assert target.shape == (B, C), target.shape
        t_arr = target.reshape(B, 1, C)           # metadata-only reshape
        t_spec = pl.BlockSpec((1, 1, C), lambda b, j: (b, 0, 0))

    partials = pl.pallas_call(
        _make_token_soft_ce_kernel(N, tok_tile, per_token_targets),
        out_shape=jax.ShapeDtypeStruct((B, num_tok_blocks, 8, 128), jnp.float32),
        grid_spec=pltpu.PrefetchScalarGridSpec(
            num_scalar_prefetch=0,
            grid=(B, num_tok_blocks),
            in_specs=[
                pl.BlockSpec((1, tok_tile, C), lambda b, j: (b, j, 0)),
                t_spec,
            ],
            out_specs=pl.BlockSpec((1, 1, 8, 128), lambda b, j: (b, j, 0, 0)),
        ),
        compiler_params=pltpu.CompilerParams(
            dimension_semantics=("parallel", "parallel"),
            vmem_limit_bytes=vmem_limit),
    )(aux_output, t_arr)

    # Tiny [B, num_blocks] reduction in plain JAX.
    return jnp.sum(partials[:, :, 0, 0]) / jnp.float32(B * N)


def token_label_cross_entropy(x, target, *, dense_weight=1.0, cls_weight=1.0,
                              aux_tok_tile=None):
    """Forward of TokenLabelCrossEntropy. x = (output[B,C], aux_output[B,N,C], bb)."""
    output, aux_output, bb = x
    bbx1, bby1, bbx2, bby2 = bb
    B, N, C = aux_output.shape

    if target.ndim == 2:
        target_cls = target
        # Per-token target == the cls target repeated N times; streamed row-wise
        # by the kernel's BlockSpec, never materialized as [B*N, C].
        target_aux = target
        per_token_targets = False
    else:
        target_cls = target[:, :, 1]
        # Keep the class-major [B, C, N] layout; the kernel transposes each
        # (C, tok_tile) block on the XLU (no wrapper transpose + reshape).
        target_aux = target[:, :, 2:]
        per_token_targets = True

    lam = jnp.asarray(
        1.0 - (bbx2 - bbx1) * (bby2 - bby1) / N, dtype=jnp.float32)
    mixed = lam * target_cls + (1.0 - lam) * jnp.flip(target_cls, axis=0)
    target_cls = jnp.where(lam < 1.0, mixed, target_cls)

    # cls head is tiny ([B, C]); plain JAX beats a second pallas_call launch.
    loss_cls = _soft_ce_plain(output, target_cls)
    # token (aux) loss is the memory-bound hot path -> Pallas kernel.
    loss_aux = token_soft_cross_entropy(aux_output, target_aux,
                                        per_token_targets,
                                        tok_tile=aux_tok_tile)
    return cls_weight * loss_cls + dense_weight * loss_aux


def _reference(x, target, dense_weight=1.0, cls_weight=1.0):
    """Pure-JAX reference matching the PyTorch semantics."""
    output, aux_output, bb = x
    bbx1, bby1, bbx2, bby2 = bb
    B, N, C = aux_output.shape
    if target.ndim == 2:
        target_cls = target
        target_aux = jnp.tile(target, (1, N)).reshape(B * N, C)
    else:
        target_cls = target[:, :, 1]
        target_aux = jnp.transpose(target[:, :, 2:], (0, 2, 1)).reshape(-1, C)
    lam = 1.0 - (bbx2 - bbx1) * (bby2 - bby1) / N
    if lam < 1.0:
        target_cls = lam * target_cls + (1 - lam) * jnp.flip(target_cls, 0)
    aux_flat = aux_output.reshape(-1, C)

    def soft_ce(logits, tgt):
        lsm = jax.nn.log_softmax(logits, axis=-1)
        return jnp.mean(jnp.sum(-tgt * lsm, axis=-1))

    return cls_weight * soft_ce(output, target_cls) + dense_weight * soft_ce(
        aux_flat, target_aux)


if __name__ == "__main__":
    key = jax.random.PRNGKey(0)
    k1, k2, k3, k4, k5, k6 = jax.random.split(key, 6)

    def check(loss, ref, name):
        loss = jax.block_until_ready(loss)
        assert jnp.allclose(loss, ref, rtol=1e-4, atol=1e-5), (name, loss, ref)

    # --- Case 1: 3-D token-labeling target (small shapes) ------------------
    B, N, C = 2, 8, 32
    output = jax.random.normal(k1, (B, C), dtype=jnp.float32)
    aux_output = jax.random.normal(k2, (B, N, C), dtype=jnp.float32)
    raw = jax.random.normal(k3, (B, C, 2 + N), dtype=jnp.float32)
    target3 = jax.nn.softmax(raw, axis=1)        # soft distributions over classes
    bb = (0.0, 0.0, 2.0, 2.0)                    # lam = 1 - 4/8 = 0.5 (< 1: flip-mix)

    loss = token_label_cross_entropy((output, aux_output, bb), target3)
    check(loss, _reference((output, aux_output, bb), target3), "3d-target")

    # --- Case 2: 2-D target (target streamed row-wise, never tiled) --------
    target2 = jax.nn.softmax(jax.random.normal(k4, (B, C), dtype=jnp.float32), -1)
    loss2 = token_label_cross_entropy((output, aux_output, bb), target2)
    check(loss2, _reference((output, aux_output, bb), target2), "2d-target")

    # --- Case 3: ragged token tiling (N not divisible by tok_tile) ---------
    Nr = 200
    aux_r = jax.random.normal(k5, (B, Nr, C), dtype=jnp.float32)
    raw_r = jax.random.normal(k6, (B, C, 2 + Nr), dtype=jnp.float32)
    target3_r = jax.nn.softmax(raw_r, axis=1)
    bb_r = (0.0, 0.0, 5.0, 5.0)                  # lam = 1 - 25/200 (< 1)

    loss3 = token_label_cross_entropy((output, aux_r, bb_r), target3_r,
                                      aux_tok_tile=128)
    check(loss3, _reference((output, aux_r, bb_r), target3_r), "3d-ragged")

    target2_r = target2
    loss4 = token_label_cross_entropy((output, aux_r, bb_r), target2_r,
                                      aux_tok_tile=128)
    check(loss4, _reference((output, aux_r, bb_r), target2_r), "2d-ragged")

    print("KERNEL_OK")
</pallas_src>

<mosaic_0001>
module attributes {stable_mosaic.version = 11 : i64} {
  func.func @kernel(%arg0: i32, %arg1: i32, %arg2: memref<1x8x32xf32, #tpu.memory_space<vmem>>, %arg3: memref<1x32x8xf32, #tpu.memory_space<vmem>>, %arg4: memref<1x1x8x128xf32, #tpu.memory_space<vmem>>) attributes {dimension_semantics = [#tpu.dimension_semantics<parallel>, #tpu.dimension_semantics<parallel>], iteration_bounds = array<i64: 2, 1>, scalar_prefetch = 0 : i64, scratch_operands = 0 : i64, tpu.core_type = #tpu.core_type<tc>, window_params = [{transform_indices = @transform_0, window_bounds = array<i64: 1, 8, 32>}, {transform_indices = @transform_1, window_bounds = array<i64: 1, 32, 8>}, {transform_indices = @transform_2, window_bounds = array<i64: 1, 1, 8, 128>}]} {
    %c0 = arith.constant 0 : index
    %c0_0 = arith.constant 0 : index
    %c0_1 = arith.constant 0 : index
    %0 = vector.load %arg2[%c0, %c0_0, %c0_1] : memref<1x8x32xf32, #tpu.memory_space<vmem>>, vector<1x8x32xf32>
    %1 = vector.shape_cast %0 : vector<1x8x32xf32> to vector<8x32xf32>
    %c0_2 = arith.constant 0 : index
    %c0_3 = arith.constant 0 : index
    %c0_4 = arith.constant 0 : index
    %2 = vector.load %arg3[%c0_2, %c0_3, %c0_4] : memref<1x32x8xf32, #tpu.memory_space<vmem>>, vector<1x32x8xf32>
    %3 = vector.shape_cast %2 : vector<1x32x8xf32> to vector<32x8xf32>
    %4 = tpu.transpose %3, [1, 0] : vector<32x8xf32> -> vector<8x32xf32>
    %cst = arith.constant dense<0xFF800000> : vector<8xf32>
    %5 = vector.multi_reduction <maximumf>, %1, %cst [1] : vector<8x32xf32> to vector<8xf32>
    %6 = vector.shape_cast %5 : vector<8xf32> to vector<8x1xf32>
    %7 = vector.broadcast %6 : vector<8x1xf32> to vector<8x32xf32>
    %8 = arith.subf %1, %7 : vector<8x32xf32>
    %9 = math.exp %8 : vector<8x32xf32>
    %cst_5 = arith.constant dense<0.000000e+00> : vector<8xf32>
    %10 = vector.multi_reduction <add>, %9, %cst_5 [1] : vector<8x32xf32> to vector<8xf32>
    %11 = vector.shape_cast %10 : vector<8xf32> to vector<8x1xf32>
    %12 = math.log %11 : vector<8x1xf32>
    %cst_6 = arith.constant dense<0.000000e+00> : vector<8xf32>
    %13 = vector.multi_reduction <add>, %4, %cst_6 [1] : vector<8x32xf32> to vector<8xf32>
    %14 = vector.shape_cast %13 : vector<8xf32> to vector<8x1xf32>
    %15 = arith.mulf %4, %8 : vector<8x32xf32>
    %cst_7 = arith.constant dense<0.000000e+00> : vector<8xf32>
    %16 = vector.multi_reduction <add>, %15, %cst_7 [1] : vector<8x32xf32> to vector<8xf32>
    %17 = vector.shape_cast %16 : vector<8xf32> to vector<8x1xf32>
    %18 = arith.mulf %14, %12 : vector<8x1xf32>
    %19 = arith.subf %18, %17 : vector<8x1xf32>
    %20 = vector.shape_cast %19 : vector<8x1xf32> to vector<1x8x1xf32>
    %cst_8 = arith.constant dense<0.000000e+00> : vector<1xf32>
    %21 = vector.multi_reduction <add>, %20, %cst_8 [1, 2] : vector<1x8x1xf32> to vector<1xf32>
    %22 = vector.shape_cast %21 : vector<1xf32> to vector<1x1x1xf32>
    %23 = vector.extract %22[0, 0, 0] : f32 from vector<1x1x1xf32>
    %24 = vector.broadcast %23 : f32 to vector<1x1x8x128xf32>
    %c0_9 = arith.constant 0 : index
    %c0_10 = arith.constant 0 : index
    %c0_11 = arith.constant 0 : index
    %c0_12 = arith.constant 0 : index
    %25 = vector.load %arg4[%c0_9, %c0_10, %c0_11, %c0_12] : memref<1x1x8x128xf32, #tpu.memory_space<vmem>>, vector<1x1x8x128xf32>
    tpu.vector_store %arg4[%c0_9, %c0_10, %c0_11, %c0_12], %24 {strides = array<i32>} : memref<1x1x8x128xf32, #tpu.memory_space<vmem>>, vector<1x1x8x128xf32>,
    return
  }
  func.func @transform_0(%arg0: i32, %arg1: i32) -> (i32, i32, i32) {
    %c0_i32 = arith.constant 0 : i32
    %c0_i32_0 = arith.constant 0 : i32
    return %arg0, %arg1, %c0_i32 : i32, i32, i32
  }
  func.func @transform_1(%arg0: i32, %arg1: i32) -> (i32, i32, i32) {
    %c0_i32 = arith.constant 0 : i32
    %c0_i32_0 = arith.constant 0 : i32
    return %arg0, %c0_i32, %arg1 : i32, i32, i32
  }
  func.func @transform_2(%arg0: i32, %arg1: i32) -> (i32, i32, i32, i32) {
    %c0_i32 = arith.constant 0 : i32
    %c0_i32_0 = arith.constant 0 : i32
    %c0_i32_1 = arith.constant 0 : i32
    return %arg0, %arg1, %c0_i32, %c0_i32_0 : i32, i32, i32, i32
  }
}

</mosaic_0001>

<llo_original>
// kernel: tpu_custom_call.1
$region0: #{tpu_custom_call.1}
  #allocation0 [shape = 'u32[]', space=smem, size = 0x4, offset = 0x4, fixed_abs, tag = 'smem constant byte address 0x4 - core index']
  #allocation1 [shape = 'u32[72,128]{1,0:T(1,128)}', space=vmem, size = 0x9000, scoped, tag = 'internal scratch']
  %s0 = inlined_call_operand.vmem [shape: f32[2,8,32], index: 0, kind: input, shape index: {}]
  %s1 = inlined_call_operand.vmem [shape: f32[2,32,8], index: 1, kind: input, shape index: {}]
  %s2 = inlined_call_operand.hbm [shape: f32[2,1,8,128], index: 2, kind: output, shape index: {}]
  %s3 = sld [smem:[#allocation0]]
  $region41: #{tpu_custom_call.1} parent=0
    _
  %s5 = ssub.s32 1, %s3
  %s6 = scalar_select 0, %s5, %s3
  $region1: #{tpu_custom_call.1} parent=0
    #allocation2 [shape = 'u8[8192]{0}', space=vmem, size = 0x2000, scoped, tag = 'output window, operand 0']
    #allocation3 [shape = 's32[2]{0}', space=sflag, size = 0x8, scoped, tag = 'scoped memory for tpu_custom_call.1']
    %7 = vsyncpa [#allocation3], 0
    %s8 = scalar_lea.sflag [#allocation3], 1
    %9 = vsyncpa %s8, 0
    loop: start=0, step=1, limit=4
    $region2: #{tpu_custom_call.1} parent=1 // loop_pre_header
      _
    $region3: #{tpu_custom_call.1} parent=1 // loop_header
      %s11 = sphi 0, %s15
      %p12 = scmp.ge.s32.totalorder %s11, 4
      %s18 = sphi 0, %s30
      %s19 = sphi 0, %s26
      %s20 = sphi 0, %s18
      %s21 = sphi 0, %s19
      %s22 = sphi 0, %s20
      %s23 = sphi 0, %s21
      %s35 = sphi 0, %s37
      %s38 = sphi 0, %s35
      %s39 = sphi 0, %s38
      %s55 = sphi 0, %s39
      %s63 = sphi 0, %s65
      %s66 = sphi 0, %s63
      %s67 = sphi 0, %s66
      %s83 = sphi 0, %s67
      %s91 = sphi 0, %s93
      %s94 = sphi 0, %s91
      %s95 = sphi 0, %s94
      %s111 = sphi 0, %s95
    $region4: #{tpu_custom_call.1} parent=1 // loop_header_branch
      %14 = sbr.rel (%p12) target = $region8
    $region5: #{tpu_custom_call.1} parent=1 // loop_body
      %s16 = ssub.s32 %s11, 1
      %s17 = ssub.s32 %s11, 2
      %s24 = sadd.s32 1, %s19
      %p25 = scmp.ge.s32.totalorder %s24, 1
      %s26 = scalar_select %p25, 0, %s24
      %s27 = sadd.s32 1, %s18
      %s28 = scalar_select %p25, %s27, %s18
      %p29 = scmp.ge.s32.totalorder %s28, 2
      %s30 = scalar_select %p29, 0, %s28
      %s31 = ssub.s32 %s18, %s30
      %s32 = ssub.s32 %s19, %s26
      %s33 = sor.u32 %s31, %s32
      %p34 = scmp.eq.s32.totalorder %s33, 0
      %s36 = sadd.s32 %s35, 1
      %s37 = scalar_select %p34, %s35, %s36
      %p40 = pneg %p34
      %p41 = scmp.eq.s32.totalorder %s11, 1
      %p42 = por %p40, %p41
      %p43 = scmp.ne.s32.totalorder %s35, %s38
      %p44 = scmp.eq.s32.totalorder %s11, 0
      %p45 = por %p43, %p44
      %p46 = scmp.ne.s32.totalorder %s35, %s38
      %p47 = scmp.eq.s32.totalorder %s16, 1
      %p48 = por %p46, %p47
      %p49 = scmp.ne.s32.totalorder %s38, %s39
      %p50 = scmp.eq.s32.totalorder %s16, 0
      %p51 = por %p49, %p50
      %p52 = scmp.ne.s32.totalorder %s38, %s39
      %p53 = scmp.eq.s32.totalorder %s17, 1
      %p54 = por %p52, %p53
      %p56 = scmp.ne.s32.totalorder %s39, %s55
      %p57 = scmp.eq.s32.totalorder %s17, 0
      %p58 = por %p56, %p57
      %s59 = ssub.s32 %s18, %s30
      %s60 = ssub.s32 %s19, %s26
      %s61 = sor.u32 %s59, %s60
      %p62 = scmp.eq.s32.totalorder %s61, 0
      %s64 = sadd.s32 %s63, 1
      %s65 = scalar_select %p62, %s63, %s64
      %p68 = pneg %p62
      %p69 = scmp.eq.s32.totalorder %s11, 1
      %p70 = por %p68, %p69
      %p71 = scmp.ne.s32.totalorder %s63, %s66
      %p72 = scmp.eq.s32.totalorder %s11, 0
      %p73 = por %p71, %p72
      %p74 = scmp.ne.s32.totalorder %s63, %s66
      %p75 = scmp.eq.s32.totalorder %s16, 1
      %p76 = por %p74, %p75
      %p77 = scmp.ne.s32.totalorder %s66, %s67
      %p78 = scmp.eq.s32.totalorder %s16, 0
      %p79 = por %p77, %p78
      %p80 = scmp.ne.s32.totalorder %s66, %s67
      %p81 = scmp.eq.s32.totalorder %s17, 1
      %p82 = por %p80, %p81
      %p84 = scmp.ne.s32.totalorder %s67, %s83
      %p85 = scmp.eq.s32.totalorder %s17, 0
      %p86 = por %p84, %p85
      %s87 = ssub.s32 %s18, %s30
      %s88 = ssub.s32 %s19, %s26
      %s89 = sor.u32 %s87, %s88
      %p90 = scmp.eq.s32.totalorder %s89, 0
      %s92 = sadd.s32 %s91, 1
      %s93 = scalar_select %p90, %s91, %s92
      %p96 = pneg %p90
      %p97 = scmp.eq.s32.totalorder %s11, 1
      %p98 = por %p96, %p97
      %p99 = scmp.ne.s32.totalorder %s91, %s94
      %p100 = scmp.eq.s32.totalorder %s11, 0
      %p101 = por %p99, %p100
      %p102 = scmp.ne.s32.totalorder %s91, %s94
      %p103 = scmp.eq.s32.totalorder %s16, 1
      %p104 = por %p102, %p103
      %p105 = scmp.ne.s32.totalorder %s94, %s95
      %p106 = scmp.eq.s32.totalorder %s16, 0
      %p107 = por %p105, %p106
      %p108 = scmp.ne.s32.totalorder %s94, %s95
      %p109 = scmp.eq.s32.totalorder %s17, 1
      %p110 = por %p108, %p109
      %p112 = scmp.ne.s32.totalorder %s95, %s111
      %p113 = scmp.eq.s32.totalorder %s17, 0
      %p114 = por %p112, %p113
      %p115 = scmp.le.s32.totalorder 1, %s11
      %p116 = scmp.lt.s32.totalorder %s11, 3
      %p117 = pnand %p115, %p116
      %p118 = pneg %p117
      // Predicated region
      $region9: #{tpu_custom_call.1} parent=5 // pred_check
        _
      $region10: #{tpu_custom_call.1} parent=5 // pred_check_branch
        %120 = sbr.rel (%p117) target = $region12
      $region11: #{tpu_custom_call.1} parent=5 // pred_region
        %s121 = ssub.s32 %s11, 1
      $region12: #{tpu_custom_call.1} parent=5 // pred_fallthru
        _
      %p122 = scmp.lt.s32.totalorder %s11, 2
      // Predicated region
      $region13: #{tpu_custom_call.1} parent=5 // pred_check
        %p123 = pneg %p122
      $region14: #{tpu_custom_call.1} parent=5 // pred_check_branch
        %125 = sbr.rel (%p123) target = $region16
      $region15: #{tpu_custom_call.1} parent=5 // pred_region
        // Predicated region
        $region17: #{tpu_custom_call.1} parent=15 // pred_check
          %p126 = pneg %p45
        $region18: #{tpu_custom_call.1} parent=15 // pred_check_branch
          %128 = sbr.rel (%p126) target = $region20
        $region19: #{tpu_custom_call.1} parent=15 // pred_region
          %p129 = scmp.lt.s32.totalorder %s18, 1
          %s130 = scalar_select %p129, %s18, 1
          %p131 = scmp.lt.s32.totalorder %s19, 0
          %s132 = scalar_select %p131, %s19, 0
          %s133 = sadd.s32 %s132, %s130
          %s134 = smul.addr %s133, 8
          %s135 = scalar_lea.vmem %s0, %s134
        $region20: #{tpu_custom_call.1} parent=15 // pred_fallthru
          _
        // Predicated region
        $region21: #{tpu_custom_call.1} parent=15 // pred_check
          %p136 = pneg %p73
        $region22: #{tpu_custom_call.1} parent=15 // pred_check_branch
          %138 = sbr.rel (%p136) target = $region24
        $region23: #{tpu_custom_call.1} parent=15 // pred_region
          %p139 = scmp.lt.s32.totalorder %s18, 1
          %s140 = scalar_select %p139, %s18, 1
          %p141 = scmp.lt.s32.totalorder %s19, 0
          %s142 = scalar_select %p141, %s19, 0
          %s143 = smul.addr %s140, 4
          %s144 = sadd.s32 %s142, %s143
          %s145 = smul.addr %s144, 8
          %s146 = scalar_lea.vmem %s1, %s145
        $region24: #{tpu_custom_call.1} parent=15 // pred_fallthru
          _
      $region16: #{tpu_custom_call.1} parent=5 // pred_fallthru
        _
      %p147 = scmp.le.s32.totalorder 1, %s11
      %p148 = scmp.lt.s32.totalorder %s11, 3
      %p149 = pnand %p147, %p148
      %p150 = pneg %p149
      // Predicated region
      $region25: #{tpu_custom_call.1} parent=5 // pred_check
        _
      $region26: #{tpu_custom_call.1} parent=5 // pred_check_branch
        %152 = sbr.rel (%p149) target = $region28
      $region27: #{tpu_custom_call.1} parent=5 // pred_region
        %s153 = ssub.s32 %s11, 1
        %p154 = scmp.lt.s32.totalorder %s20, 1
        %s155 = scalar_select %p154, %s20, 1
        %p156 = scmp.lt.s32.totalorder %s21, 0
        %s157 = scalar_select %p156, %s21, 0
        %s158 = sadd.s32 %s157, %s155
        %s159 = smul.addr %s158, 8
        %s160 = scalar_lea.vmem %s0, %s159
        %p161 = pneg %p51
        %p162 = pneg %p48
        %p163 = scmp.lt.s32.totalorder %s20, 1
        %s164 = scalar_select %p163, %s20, 1
        %p165 = scmp.lt.s32.totalorder %s21, 0
        %s166 = scalar_select %p165, %s21, 0
        %s167 = smul.addr %s164, 4
        %s168 = sadd.s32 %s166, %s167
        %s169 = smul.addr %s168, 8
        %s170 = scalar_lea.vmem %s1, %s169
        %p171 = pneg %p79
        %p172 = pneg %p76
        %p173 = pneg %p107
        %p174 = pneg %p104
        %s175 = sand.u32 %s94, 1
        %s176 = scalar_lea.sflag [#allocation3], %s175
        %s177 = sand.u32 %s94, 1
        %s178 = smul.addr %s177, 8
        %s179 = scalar_lea.vmem [#allocation2], %s178
        %p180 = scmp.lt.s32.totalorder %s20, 1
        %s181 = scalar_select %p180, %s20, 1
        %p182 = scmp.lt.s32.totalorder %s21, 0
        %s183 = scalar_select %p182, %s21, 0
        %s184 = sadd.s32 %s183, %s181
        %s185 = smul.addr %s184, 8
        %s186 = scalar_lea.vmem %s0, %s185
        %p187 = scmp.lt.s32.totalorder %s20, 1
        %s188 = scalar_select %p187, %s20, 1
        %p189 = scmp.lt.s32.totalorder %s21, 0
        %s190 = scalar_select %p189, %s21, 0
        %s191 = smul.addr %s188, 4
        %s192 = sadd.s32 %s190, %s191
        %s193 = smul.addr %s192, 8
        %s194 = scalar_lea.vmem %s1, %s193
        %v195 = vld [vmem:[%s186] sm:$0xff]
        %v196 = vld [vmem:[%s194] sm:$0xff]
        %v197 = vld [vmem:[%s194 + $0x8] sm:$0xff]
        %v198 = vld [vmem:[%s194 + $0x10] sm:$0xff]
        %v199 = vld [vmem:[%s194 + $0x18] sm:$0xff]
        %200 = vxpose.xlu0.b32.start [1/16] %v196, 128
        %201 = vxpose.xlu0.b32.cont [2/16] %v197, 128
        %202 = vxpose.xlu0.b32.cont [3/16] %v198, 128
        %203 = vxpose.xlu0.b32.cont [4/16] %v199, 128
        %204 = vxpose.xlu0.b32.cont [5/16] 0.0, 128
        %205 = vxpose.xlu0.b32.cont [6/16] 0.0, 128
        %206 = vxpose.xlu0.b32.cont [7/16] 0.0, 128
        %207 = vxpose.xlu0.b32.cont [8/16] 0.0, 128
        %208 = vxpose.xlu0.b32.cont [9/16] 0.0, 128
        %209 = vxpose.xlu0.b32.cont [10/16] 0.0, 128
        %210 = vxpose.xlu0.b32.cont [11/16] 0.0, 128
        %211 = vxpose.xlu0.b32.cont [12/16] 0.0, 128
        %212 = vxpose.xlu0.b32.cont [13/16] 0.0, 128
        %213 = vxpose.xlu0.b32.cont [14/16] 0.0, 128
        %214 = vxpose.xlu0.b32.cont [15/16] 0.0, 128
        %215 = vxpose.xlu0.b32.end [16/16] 0.0, 128
        %v216 = vpop.trf.xlu0
        %v217 = vpop.trf.xlu0
        %v218 = vpop.trf.xlu0
        %v219 = vpop.trf.xlu0
        %v220 = vpop.trf.xlu0
        %v221 = vpop.trf.xlu0
        %v222 = vpop.trf.xlu0
        %v223 = vpop.trf.xlu0
        %v224 = vpop.trf.xlu0
        %v225 = vpop.trf.xlu0
        %v226 = vpop.trf.xlu0
        %v227 = vpop.trf.xlu0
        %v228 = vpop.trf.xlu0
        %v229 = vpop.trf.xlu0
        %v230 = vpop.trf.xlu0
        %v231 = vpop.trf.xlu0
        %vm232 = vcmask 261120
        %v233 = vsel %vm232, %v195, -inf
        %234 = vmax.xlane.f32.xlu0 %v233
        %v235 = vpop.xlane.xlu0 %234
        %v236 = vsub.f32 %v195, %v235
        %v237 = vmul.f32 %v236, 1.442695
        %v238 = vpow.pop %v237
        %v239 = vsel %vm232, %v238, 0.0
        %240 = vadd.xlane.f32.xlu0 %v239
        %v241 = vpop.xlane.xlu0 %240
        %v242 = vlog2.pop %v241
        %v243 = vmul.f32 %v242, 0.6931472
        %v244 = vsel %vm232, %v216, 0.0
        %245 = vadd.xlane.f32.xlu0 %v244
        %v246 = vpop.xlane.xlu0 %245
        %v247 = vmul.f32 %v216, %v236
        %v248 = vsel %vm232, %v247, 0.0
        %249 = vadd.xlane.f32.xlu0 %v248
        %v250 = vpop.xlane.xlu0 %249
        %v251 = vmul.f32 %v246, %v243
        %v252 = vsub.f32 %v251, %v250
        %vm253 = vcmask 7168
        %v254 = vsel %vm253, %v252, 0.0
        %255 = vadd.xlane.f32.xlu0 %v254
        %v256 = vpop.xlane.xlu0 %255
        %v257 = vrot.slane %v256, 4
        %v258 = vadd.f32 %v256, %v257
        %v259 = vrot.slane %v258, 2
        %v260 = vadd.f32 %v258, %v259
        %v261 = vrot.slane %v260, 1
        %v262 = vadd.f32 %v260, %v261
        %s263 = vtos %v262
        %v264 = vstv %s263
        %265 = vst [vmem:[%s179] sm:$0xff] %v264
        %s266 = sand.u32 %s94, 1
        %s267 = scalar_lea.sflag [#allocation3], %s266
        %s268 = sand.u32 %s94, 1
        %s269 = smul.addr %s268, 8
        %s270 = scalar_lea.vmem [#allocation2], %s269
        // Predicated region
        $region29: #{tpu_custom_call.1} parent=27 // pred_check
          %p271 = pneg %p104
        $region30: #{tpu_custom_call.1} parent=27 // pred_check_branch
          %273 = sbr.rel (%p271) target = $region32
        $region31: #{tpu_custom_call.1} parent=27 // pred_region
          %275 = vsyncadd %s267, 0
          %s276 = sadd.s32 %s21, %s20
          %s277 = smul.addr %s276, 8
          %s278 = scalar_lea.hbm %s2, %s277
          %s280 = sshll.u32 %s270, 4
          %s281 = int_to_ptr.vmem [resolvable:$true] %s280
          %s282 = sshll.u32 %s278, 4
          %s283 = int_to_ptr.hbm [resolvable:$true] %s282
          %285 = dma.vmem_to_hbm [thread:$0]  %s281, 128, %s283, %s267
        $region32: #{tpu_custom_call.1} parent=27 // pred_fallthru
          _
      $region28: #{tpu_custom_call.1} parent=5 // pred_fallthru
        _
      %p286 = scmp.le.s32.totalorder 2, %s11
      // Predicated region
      $region33: #{tpu_custom_call.1} parent=5 // pred_check
        %p287 = pneg %p286
      $region34: #{tpu_custom_call.1} parent=5 // pred_check_branch
        %289 = sbr.rel (%p287) target = $region36
      $region35: #{tpu_custom_call.1} parent=5 // pred_region
        %s290 = ssub.s32 %s11, 2
        // Predicated region
        $region37: #{tpu_custom_call.1} parent=35 // pred_check
          %p291 = pneg %p110
        $region38: #{tpu_custom_call.1} parent=35 // pred_check_branch
          %293 = sbr.rel (%p291) target = $region40
        $region39: #{tpu_custom_call.1} parent=35 // pred_region
          %s294 = sand.u32 %s95, 1
          %s295 = scalar_lea.sflag [#allocation3], %s294
          %s296 = sand.u32 %s95, 1
          %s297 = smul.addr %s296, 8
          %s298 = scalar_lea.vmem [#allocation2], %s297
          %300 = dma.done %s295, 128
        $region40: #{tpu_custom_call.1} parent=35 // pred_fallthru
          _
      $region36: #{tpu_custom_call.1} parent=5 // pred_fallthru
        _
    $region6: #{tpu_custom_call.1} parent=1 // loop_footer
      %s15 = sadd.s32 1, %s11
    $region7: #{tpu_custom_call.1} parent=1 // loop_footer_branch
      %10 = sbr.rel target = $region3
    $region8: #{tpu_custom_call.1} parent=1 // loop_exit
      _
    %301 = vsyncpa [#allocation3], 1
    %s302 = scalar_lea.sflag [#allocation3], 1
    %303 = vsyncpa %s302, 1

</llo_original>
